<compile_context>
chip_gen: v6e
topology: v6e:2x2x1
jax: 0.10.0
libtpu: 0.0.40
codegen_flags: <defaults>
</compile_context>

<pallas_src>
import functools

import jax
import jax.numpy as jnp
import numpy as np
from jax.experimental import pallas as pl
from jax.experimental.pallas import tpu as pltpu


# ---------------------------------------------------------------------------
# Fused H-direction-im2col + matmul + bias kernel.
#
# Per grid step g the lhs block holds, for one image / one tile of `th`
# output patch-rows, the W-gathered rows
#   xs[q*Wo + ow, r*P*Cin + kj*Cin + c] = x_pad[(tile*th + q)*stride + r,
#                                               ow*stride + kj, c]
# with q in [0, th + nd - 1) and r in [0, stride).  The convolution is
#   out[s*Wo + ow, :] = sum_d  xs[(s + d)*Wo + ow, :] @ W_d ,   d in [0, nd)
# i.e. `nd` MXU matmuls over contiguous, statically offset row windows of the
# same VMEM block, accumulated in f32.  (When rows are paired for lane-dense
# stores, `row_off`, `out_rows` and the weights are simply halved/doubled in
# the wrapper; the kernel body is unchanged.)
# ---------------------------------------------------------------------------
def _conv_embed_kernel(xs_ref, w_ref, b_ref, o_ref, *, nd, out_rows, row_off):
    acc = None
    for d in range(nd):                                   # static unroll (nd == 2)
        x_d = xs_ref[0, pl.ds(d * row_off, out_rows), :]  # static slice, zero cost
        p = jnp.dot(x_d, w_ref[d], preferred_element_type=jnp.float32)
        acc = p if acc is None else acc + p
    o_ref[0, :, :] = (acc + b_ref[...]).astype(o_ref.dtype)


# ---------------------------------------------------------------------------
# ConvEmbed forward
# ---------------------------------------------------------------------------
def conv_embed_forward(x_tokens, size, params, *, patch_size=7, stride=4,
                       padding=2, pre_norm=True, eps=1e-5, tile_rows=1024,
                       out_dtype=jnp.float32):
    """x_tokens: (B, H*W, C_in).  Returns ((B, Ho*Wo, E), (Ho, Wo))."""
    H, W = size
    B, N, Cin = x_tokens.shape
    assert N == H * W
    E = params["proj_b"].shape[0]

    # ---- pre-norm LayerNorm over channels (f32, Cin is tiny; left to XLA so
    #      it fuses with the pad / W-gather glue below) ----
    x = x_tokens.astype(jnp.float32)
    if pre_norm:
        mean = jnp.mean(x, axis=-1, keepdims=True)
        var = jnp.mean(jnp.square(x - mean), axis=-1, keepdims=True)
        x = (x - mean) * jax.lax.rsqrt(var + eps)
        x = (x * params["ln_gamma"].reshape(1, 1, Cin)
             + params["ln_beta"].reshape(1, 1, Cin))
    # TODO(synk): pre_norm=False (post-projection LayerNorm) path not implemented.

    # Cast to bf16 *before* all data-movement glue -> halves its HBM traffic.
    x = x.astype(jnp.bfloat16)

    # ---- NHWC, spatial zero-pad ----
    x = x.reshape(B, H, W, Cin)
    xp = jnp.pad(x, ((0, 0), (padding, padding), (padding, padding), (0, 0)))
    Hp, Wp = H + 2 * padding, W + 2 * padding
    Ho = (Hp - patch_size) // stride + 1
    Wo = (Wp - patch_size) // stride + 1

    nd = pl.cdiv(patch_size, stride)        # ki = r + stride*d,  d in [0, nd)
    F = patch_size * Cin                    # per-(row, r) feature width (21)
    Kl = stride * F                         # lhs lane width per row (84)

    # ---- W-direction im2col only (XLA glue, bf16, ~patch/stride duplication) ----
    cols = []
    for kj in range(patch_size):
        cols.append(jax.lax.slice(
            xp, (0, 0, kj, 0),
            (B, Hp, kj + stride * (Wo - 1) + 1, Cin),
            (1, 1, stride, 1)))                              # (B, Hp, Wo, Cin)
    xw = jnp.stack(cols, axis=3).reshape(B, Hp, Wo, F)       # (kj, c) flattened

    # ---- tile height over output patch-rows; prefer an exact divisor of Ho so
    #      there are no padded output rows and no final slice copy ----
    th_max = max(1, min(Ho, tile_rows // max(Wo, 1)))
    th = 1
    for cand in range(th_max, 0, -1):
        if Ho % cand == 0:
            th = cand
            break
    if th < max(1, th_max // 2):            # divisor too small -> pad instead
        th = th_max
    nh = pl.cdiv(Ho, th)
    Ho_pad = nh * th

    # ---- regroup H by residue mod stride with a (nd-1)-group halo per tile,
    #      flatten to the kernel's (rows, lanes) layout ----
    NQ = th + nd - 1
    H_need = (Ho_pad + nd - 1) * stride
    if H_need > Hp:
        xw = jnp.pad(xw, ((0, 0), (0, H_need - Hp), (0, 0), (0, 0)))
    elif H_need < Hp:
        xw = xw[:, :H_need]
    xh = xw.reshape(B, H_need // stride, stride, Wo, F)        # (B, Hq, r, Wo, F)
    qidx = np.arange(nh)[:, None] * th + np.arange(NQ)[None, :]
    xs = jnp.take(xh, jnp.asarray(qidx), axis=1)               # (B, nh, NQ, r, Wo, F)
    xs = xs.transpose(0, 1, 2, 4, 3, 5)                        # (B, nh, NQ, Wo, r, F)
    xs = xs.reshape(B * nh, NQ * Wo, Kl)

    # ---- conv weight OIHW -> per-d (r, kj, c, e) slabs; ki >= patch zeroed ----
    w = params["proj_w"].astype(jnp.float32)                   # (E, Cin, P, P)
    w_t = jnp.transpose(w, (2, 3, 1, 0))                       # (ki, kj, c, E)
    w_t = jnp.pad(w_t, ((0, nd * stride - patch_size), (0, 0), (0, 0), (0, 0)))
    w_d = w_t.reshape(nd, stride, patch_size, Cin, E).reshape(nd, Kl, E)
    bias = params["proj_b"].astype(jnp.float32).reshape(1, E)

    # ---- x2 row pairing for lane-dense (2E = 128 wide) output stores; the
    #      block-diagonal zeros stay hidden under the memory-bound roofline ----
    pair = 2 if ((2 * E) % 128 == 0 and Wo % 2 == 0) else 1
    if pair == 2:
        xs = xs.reshape(B * nh, NQ * Wo // 2, 2 * Kl)          # free reshape
        zeros = jnp.zeros_like(w_d)
        w_d = jnp.concatenate(
            [jnp.concatenate([w_d, zeros], axis=2),
             jnp.concatenate([zeros, w_d], axis=2)], axis=1)   # (nd, 2Kl, 2E)
        bias = jnp.concatenate([bias, bias], axis=1)           # (1, 2E)
    w_d = w_d.astype(jnp.bfloat16)

    G = B * nh
    Kl_p = pair * Kl
    Nl = pair * E
    R_in = NQ * Wo // pair
    out_rows = th * Wo // pair
    row_off = Wo // pair

    kernel = functools.partial(_conv_embed_kernel, nd=nd,
                               out_rows=out_rows, row_off=row_off)
    out = pl.pallas_call(
        kernel,
        out_shape=jax.ShapeDtypeStruct((G, out_rows, Nl), out_dtype),
        grid=(G,),
        in_specs=[
            pl.BlockSpec((1, R_in, Kl_p), lambda g: (g, 0, 0)),   # streamed lhs
            pl.BlockSpec((nd, Kl_p, Nl), lambda g: (0, 0, 0)),    # resident weights
            pl.BlockSpec((1, Nl), lambda g: (0, 0)),              # resident bias
        ],
        out_specs=pl.BlockSpec((1, out_rows, Nl), lambda g: (g, 0, 0)),
        compiler_params=pltpu.CompilerParams(
            dimension_semantics=("parallel",)),                   # megacore split
    )(xs, w_d, bias)

    out = out.reshape(B, nh * th * Wo, E)          # un-pair + flatten (free)
    if Ho_pad != Ho:
        out = out[:, :Ho * Wo]
    return out, (Ho, Wo)


# ---------------------------------------------------------------------------
# Pure-JAX f32 reference (for correctness check)
# ---------------------------------------------------------------------------
def conv_embed_reference(x_tokens, size, params, *, patch_size=7, stride=4,
                         padding=2, eps=1e-5):
    H, W = size
    B, N, Cin = x_tokens.shape
    mean = jnp.mean(x_tokens, axis=-1, keepdims=True)
    var = jnp.mean((x_tokens - mean) ** 2, axis=-1, keepdims=True)
    x = (x_tokens - mean) * jax.lax.rsqrt(var + eps)
    x = x * params["ln_gamma"].reshape(1, 1, Cin) + params["ln_beta"].reshape(1, 1, Cin)
    x = x.reshape(B, H, W, Cin).transpose(0, 3, 1, 2)
    y = jax.lax.conv_general_dilated(
        x, params["proj_w"], window_strides=(stride, stride),
        padding=[(padding, padding), (padding, padding)],
        dimension_numbers=("NCHW", "OIHW", "NCHW"))
    y = y + params["proj_b"].reshape(1, -1, 1, 1)
    _, E, Ho, Wo = y.shape
    y = y.transpose(0, 2, 3, 1).reshape(B, Ho * Wo, E)
    return y, (Ho, Wo)


# ---------------------------------------------------------------------------
if __name__ == "__main__":
    # Module config (PyTorch defaults): patch_size=7, stride=4, padding=2,
    # in_chans=3, embed_dim=64, norm_layer=LayerNorm, pre_norm=True.
    patch_size, stride, padding = 7, 4, 2
    in_chans, embed_dim = 3, 64
    B, H, W = 2, 16, 16

    key = jax.random.PRNGKey(0)
    kx, kw, kb, kg, kbt = jax.random.split(key, 5)

    x_tokens = jax.random.normal(kx, (B, H * W, in_chans), dtype=jnp.float32)

    params = {
        "proj_w": 0.02 * jax.random.normal(
            kw, (embed_dim, in_chans, patch_size, patch_size), dtype=jnp.float32),
        "proj_b": 0.01 * jax.random.normal(kb, (embed_dim,), dtype=jnp.float32),
        "ln_gamma": 1.0 + 0.1 * jax.random.normal(kg, (in_chans,), dtype=jnp.float32),
        "ln_beta": 0.1 * jax.random.normal(kbt, (in_chans,), dtype=jnp.float32),
    }

    fwd = jax.jit(lambda xt, p: conv_embed_forward(
        xt, (H, W), p, patch_size=patch_size, stride=stride,
        padding=padding, pre_norm=True))
    out, hw = fwd(x_tokens, params)
    out = jax.block_until_ready(out)
    Ho, Wo = int(hw[0]), int(hw[1])

    ref, (Hr, Wr) = conv_embed_reference(
        x_tokens, (H, W), params,
        patch_size=patch_size, stride=stride, padding=padding)
    ref = jax.block_until_ready(ref)

    assert (Ho, Wo) == (Hr, Wr), ((Ho, Wo), (Hr, Wr))
    assert out.shape == (B, Ho * Wo, embed_dim), out.shape
    # bf16 MXU operands with f32 accumulation -> tolerance loosened accordingly.
    assert jnp.allclose(out, ref, atol=1e-2, rtol=1e-2), float(
        jnp.max(jnp.abs(out - ref)))

    print("KERNEL_OK")
</pallas_src>

<mosaic_0001>
module attributes {stable_mosaic.version = 11 : i64} {
  func.func @_conv_embed_kernel(%arg0: i32, %arg1: memref<1x10x168xbf16, #tpu.memory_space<vmem>>, %arg2: memref<2x168x128xbf16, #tpu.memory_space<vmem>>, %arg3: memref<1x128xf32, #tpu.memory_space<vmem>>, %arg4: memref<1x8x128xf32, #tpu.memory_space<vmem>>) attributes {dimension_semantics = [#tpu.dimension_semantics<parallel>], iteration_bounds = array<i64: 2>, scalar_prefetch = 0 : i64, scratch_operands = 0 : i64, tpu.core_type = #tpu.core_type<tc>, window_params = [{transform_indices = @transform_0, window_bounds = array<i64: 1, 10, 168>}, {pipeline_mode = #tpu.pipeline_mode<synchronous>, transform_indices = @transform_1, window_bounds = array<i64: 2, 168, 128>}, {pipeline_mode = #tpu.pipeline_mode<synchronous>, transform_indices = @transform_2, window_bounds = array<i64: 1, 128>}, {transform_indices = @transform_3, window_bounds = array<i64: 1, 8, 128>}]} {
    %c0 = arith.constant 0 : index
    %c0_0 = arith.constant 0 : index
    %c0_1 = arith.constant 0 : index
    %0 = vector.load %arg1[%c0, %c0_0, %c0_1] : memref<1x10x168xbf16, #tpu.memory_space<vmem>>, vector<1x8x168xbf16>
    %1 = vector.shape_cast %0 : vector<1x8x168xbf16> to vector<8x168xbf16>
    %c0_2 = arith.constant 0 : index
    %c0_3 = arith.constant 0 : index
    %c0_4 = arith.constant 0 : index
    %2 = vector.load %arg2[%c0_2, %c0_3, %c0_4] : memref<2x168x128xbf16, #tpu.memory_space<vmem>>, vector<1x168x128xbf16>
    %3 = vector.shape_cast %2 : vector<1x168x128xbf16> to vector<168x128xbf16>
    %cst = arith.constant dense<0.000000e+00> : vector<8x128xf32>
    %4 = tpu.matmul %1, %3, %cst {dimension_numbers = #tpu.dot_dimension_numbers<[1], [0], [0], [1], [0, 0, 1, 1], [], []>} : vector<8x168xbf16>, vector<168x128xbf16>, vector<8x128xf32> -> vector<8x128xf32>
    %c0_5 = arith.constant 0 : index
    %c2 = arith.constant 2 : index
    %c0_6 = arith.constant 0 : index
    %5 = vector.load %arg1[%c0_5, %c2, %c0_6] : memref<1x10x168xbf16, #tpu.memory_space<vmem>>, vector<1x8x168xbf16>
    %6 = vector.shape_cast %5 : vector<1x8x168xbf16> to vector<8x168xbf16>
    %c1 = arith.constant 1 : index
    %c0_7 = arith.constant 0 : index
    %c0_8 = arith.constant 0 : index
    %7 = vector.load %arg2[%c1, %c0_7, %c0_8] : memref<2x168x128xbf16, #tpu.memory_space<vmem>>, vector<1x168x128xbf16>
    %8 = vector.shape_cast %7 : vector<1x168x128xbf16> to vector<168x128xbf16>
    %cst_9 = arith.constant dense<0.000000e+00> : vector<8x128xf32>
    %9 = tpu.matmul %6, %8, %cst_9 {dimension_numbers = #tpu.dot_dimension_numbers<[1], [0], [0], [1], [0, 0, 1, 1], [], []>} : vector<8x168xbf16>, vector<168x128xbf16>, vector<8x128xf32> -> vector<8x128xf32>
    %10 = arith.addf %4, %9 : vector<8x128xf32>
    %c0_10 = arith.constant 0 : index
    %c0_11 = arith.constant 0 : index
    %11 = vector.load %arg3[%c0_10, %c0_11] : memref<1x128xf32, #tpu.memory_space<vmem>>, vector<1x128xf32>
    %12 = vector.broadcast %11 : vector<1x128xf32> to vector<8x128xf32>
    %13 = arith.addf %10, %12 : vector<8x128xf32>
    %c0_12 = arith.constant 0 : index
    %c0_13 = arith.constant 0 : index
    %c0_14 = arith.constant 0 : index
    %14 = vector.load %arg4[%c0_12, %c0_13, %c0_14] : memref<1x8x128xf32, #tpu.memory_space<vmem>>, vector<1x8x128xf32>
    %15 = vector.shape_cast %14 : vector<1x8x128xf32> to vector<8x128xf32>
    %16 = vector.shape_cast %13 : vector<8x128xf32> to vector<1x8x128xf32>
    tpu.vector_store %arg4[%c0_12, %c0_13, %c0_14], %16 {strides = array<i32>} : memref<1x8x128xf32, #tpu.memory_space<vmem>>, vector<1x8x128xf32>,
    return
  }
  func.func @transform_0(%arg0: i32) -> (i32, i32, i32) {
    %c0_i32 = arith.constant 0 : i32
    %c0_i32_0 = arith.constant 0 : i32
    %c0_i32_1 = arith.constant 0 : i32
    return %arg0, %c0_i32, %c0_i32_0 : i32, i32, i32
  }
  func.func @transform_1(%arg0: i32) -> (i32, i32, i32) {
    %c0_i32 = arith.constant 0 : i32
    %c0_i32_0 = arith.constant 0 : i32
    %c0_i32_1 = arith.constant 0 : i32
    %c0_i32_2 = arith.constant 0 : i32
    return %c0_i32, %c0_i32_0, %c0_i32_1 : i32, i32, i32
  }
  func.func @transform_2(%arg0: i32) -> (i32, i32) {
    %c0_i32 = arith.constant 0 : i32
    %c0_i32_0 = arith.constant 0 : i32
    %c0_i32_1 = arith.constant 0 : i32
    return %c0_i32, %c0_i32_0 : i32, i32
  }
  func.func @transform_3(%arg0: i32) -> (i32, i32, i32) {
    %c0_i32 = arith.constant 0 : i32
    %c0_i32_0 = arith.constant 0 : i32
    %c0_i32_1 = arith.constant 0 : i32
    return %arg0, %c0_i32, %c0_i32_0 : i32, i32, i32
  }
}

</mosaic_0001>

<llo_original>
// kernel: _lambda_.1
$region0: #{_lambda_.1}
  #allocation0 [shape = 'u32[]', space=smem, size = 0x4, offset = 0x4, fixed_abs, tag = 'smem constant byte address 0x4 - core index']
  #allocation1 [shape = 'u32[144,128]{1,0:T(1,128)}', space=vmem, size = 0x12000, scoped, tag = 'internal scratch']
  %s0 = inlined_call_operand.vmem [shape: bf16[2,10,168], index: 0, kind: input, shape index: {}]
  %s1 = inlined_call_operand.vmem [shape: bf16[2,168,128], index: 1, kind: input, shape index: {}]
  %s2 = inlined_call_operand.vmem [shape: f32[1,128], index: 2, kind: input, shape index: {}]
  %s3 = inlined_call_operand.vmem [shape: f32[2,8,128], index: 3, kind: output, shape index: {}]
  %s4 = sld [smem:[#allocation0]]
  $region45: #{_lambda_.1} parent=0
    _
  %s6 = ssub.s32 1, %s4
  %s7 = scalar_select 0, %s6, %s4
  loop: start=0, step=1, limit=4
  $region2: #{_lambda_.1} parent=0 // loop_pre_header
    _
  $region3: #{_lambda_.1} parent=0 // loop_header
    %s9 = sphi 0, %s13
    %p10 = scmp.ge.s32.totalorder %s9, 4
    %s19 = sphi 0, %s21
    %s22 = sphi 0, %s19
    %s23 = sphi 0, %s22
    %s39 = sphi 0, %s23
    %s43 = sphi 0, %s43
    %s45 = sphi 0, %s43
    %s46 = sphi 0, %s45
    %s60 = sphi 0, %s46
    %s64 = sphi 0, %s64
    %s66 = sphi 0, %s64
    %s67 = sphi 0, %s66
    %s81 = sphi 0, %s67
    %s87 = sphi 0, %s89
    %s90 = sphi 0, %s87
    %s91 = sphi 0, %s90
    %s107 = sphi 0, %s91
  $region4: #{_lambda_.1} parent=0 // loop_header_branch
    %12 = sbr.rel (%p10) target = $region8
  $region5: #{_lambda_.1} parent=0 // loop_body
    %s14 = ssub.s32 %s9, 1
    %s15 = ssub.s32 %s9, 2
    %s16 = sadd.s32 %s9, 1
    %s17 = ssub.s32 %s9, %s16
    %p18 = scmp.eq.s32.totalorder %s17, 0
    %s20 = sadd.s32 %s19, 1
    %s21 = scalar_select %p18, %s19, %s20
    %p24 = pneg %p18
    %p25 = scmp.eq.s32.totalorder %s9, 1
    %p26 = por %p24, %p25
    %p27 = scmp.ne.s32.totalorder %s19, %s22
    %p28 = scmp.eq.s32.totalorder %s9, 0
    %p29 = por %p27, %p28
    %p30 = scmp.ne.s32.totalorder %s19, %s22
    %p31 = scmp.eq.s32.totalorder %s14, 1
    %p32 = por %p30, %p31
    %p33 = scmp.ne.s32.totalorder %s22, %s23
    %p34 = scmp.eq.s32.totalorder %s14, 0
    %p35 = por %p33, %p34
    %p36 = scmp.ne.s32.totalorder %s22, %s23
    %p37 = scmp.eq.s32.totalorder %s15, 1
    %p38 = por %p36, %p37
    %p40 = scmp.ne.s32.totalorder %s23, %s39
    %p41 = scmp.eq.s32.totalorder %s15, 0
    %p42 = por %p40, %p41
    %s44 = sadd.s32 %s43, 1
    %p47 = scmp.eq.s32.totalorder %s9, 1
    %p48 = scmp.ne.s32.totalorder %s43, %s45
    %p49 = scmp.eq.s32.totalorder %s9, 0
    %p50 = por %p48, %p49
    %p51 = scmp.ne.s32.totalorder %s43, %s45
    %p52 = scmp.eq.s32.totalorder %s14, 1
    %p53 = por %p51, %p52
    %p54 = scmp.ne.s32.totalorder %s45, %s46
    %p55 = scmp.eq.s32.totalorder %s14, 0
    %p56 = por %p54, %p55
    %p57 = scmp.ne.s32.totalorder %s45, %s46
    %p58 = scmp.eq.s32.totalorder %s15, 1
    %p59 = por %p57, %p58
    %p61 = scmp.ne.s32.totalorder %s46, %s60
    %p62 = scmp.eq.s32.totalorder %s15, 0
    %p63 = por %p61, %p62
    %s65 = sadd.s32 %s64, 1
    %p68 = scmp.eq.s32.totalorder %s9, 1
    %p69 = scmp.ne.s32.totalorder %s64, %s66
    %p70 = scmp.eq.s32.totalorder %s9, 0
    %p71 = por %p69, %p70
    %p72 = scmp.ne.s32.totalorder %s64, %s66
    %p73 = scmp.eq.s32.totalorder %s14, 1
    %p74 = por %p72, %p73
    %p75 = scmp.ne.s32.totalorder %s66, %s67
    %p76 = scmp.eq.s32.totalorder %s14, 0
    %p77 = por %p75, %p76
    %p78 = scmp.ne.s32.totalorder %s66, %s67
    %p79 = scmp.eq.s32.totalorder %s15, 1
    %p80 = por %p78, %p79
    %p82 = scmp.ne.s32.totalorder %s67, %s81
    %p83 = scmp.eq.s32.totalorder %s15, 0
    %p84 = por %p82, %p83
    %s85 = ssub.s32 %s9, %s16
    %p86 = scmp.eq.s32.totalorder %s85, 0
    %s88 = sadd.s32 %s87, 1
    %s89 = scalar_select %p86, %s87, %s88
    %p92 = pneg %p86
    %p93 = scmp.eq.s32.totalorder %s9, 1
    %p94 = por %p92, %p93
    %p95 = scmp.ne.s32.totalorder %s87, %s90
    %p96 = scmp.eq.s32.totalorder %s9, 0
    %p97 = por %p95, %p96
    %p98 = scmp.ne.s32.totalorder %s87, %s90
    %p99 = scmp.eq.s32.totalorder %s14, 1
    %p100 = por %p98, %p99
    %p101 = scmp.ne.s32.totalorder %s90, %s91
    %p102 = scmp.eq.s32.totalorder %s14, 0
    %p103 = por %p101, %p102
    %p104 = scmp.ne.s32.totalorder %s90, %s91
    %p105 = scmp.eq.s32.totalorder %s15, 1
    %p106 = por %p104, %p105
    %p108 = scmp.ne.s32.totalorder %s91, %s107
    %p109 = scmp.eq.s32.totalorder %s15, 0
    %p110 = por %p108, %p109
    %p111 = scmp.le.s32.totalorder 1, %s9
    %p112 = scmp.lt.s32.totalorder %s9, 3
    %p113 = pnand %p111, %p112
    %p114 = pneg %p113
    // Predicated region
    $region9: #{_lambda_.1} parent=5 // pred_check
      _
    $region10: #{_lambda_.1} parent=5 // pred_check_branch
      %116 = sbr.rel (%p113) target = $region12
    $region11: #{_lambda_.1} parent=5 // pred_region
      %s117 = ssub.s32 %s9, 1
      // Predicated region
      $region13: #{_lambda_.1} parent=11 // pred_check
        %p118 = pneg %p56
      $region14: #{_lambda_.1} parent=11 // pred_check_branch
        %120 = sbr.rel (%p118) target = $region16
      $region15: #{_lambda_.1} parent=11 // pred_region
        _
      $region16: #{_lambda_.1} parent=11 // pred_fallthru
        _
      // Predicated region
      $region17: #{_lambda_.1} parent=11 // pred_check
        %p121 = pneg %p77
      $region18: #{_lambda_.1} parent=11 // pred_check_branch
        %123 = sbr.rel (%p121) target = $region20
      $region19: #{_lambda_.1} parent=11 // pred_region
        _
      $region20: #{_lambda_.1} parent=11 // pred_fallthru
        _
    $region12: #{_lambda_.1} parent=5 // pred_fallthru
      _
    %p124 = scmp.lt.s32.totalorder %s9, 2
    // Predicated region
    $region21: #{_lambda_.1} parent=5 // pred_check
      %p125 = pneg %p124
    $region22: #{_lambda_.1} parent=5 // pred_check_branch
      %127 = sbr.rel (%p125) target = $region24
    $region23: #{_lambda_.1} parent=5 // pred_region
      // Predicated region
      $region25: #{_lambda_.1} parent=23 // pred_check
        %p128 = pneg %p29
      $region26: #{_lambda_.1} parent=23 // pred_check_branch
        %130 = sbr.rel (%p128) target = $region28
      $region27: #{_lambda_.1} parent=23 // pred_region
        %p131 = scmp.lt.s32.totalorder %s9, 1
        %s132 = scalar_select %p131, %s9, 1
        %s133 = smul.addr %s132, 4
        %s134 = smul.addr %s133, 4
        %s135 = scalar_lea.vmem %s0, %s134
      $region28: #{_lambda_.1} parent=23 // pred_fallthru
        _
    $region24: #{_lambda_.1} parent=5 // pred_fallthru
      _
    %p136 = scmp.le.s32.totalorder 1, %s9
    %p137 = scmp.lt.s32.totalorder %s9, 3
    %p138 = pnand %p136, %p137
    %p139 = pneg %p138
    // Predicated region
    $region29: #{_lambda_.1} parent=5 // pred_check
      _
    $region30: #{_lambda_.1} parent=5 // pred_check_branch
      %141 = sbr.rel (%p138) target = $region32
    $region31: #{_lambda_.1} parent=5 // pred_region
      %s142 = ssub.s32 %s9, 1
      %p143 = scmp.lt.s32.totalorder %s14, 1
      %s144 = scalar_select %p143, %s14, 1
      %s145 = smul.addr %s144, 4
      %s146 = smul.addr %s145, 4
      %s147 = scalar_lea.vmem %s0, %s146
      %p148 = pneg %p35
      %p149 = pneg %p32
      %p150 = pneg %p56
      %p151 = pneg %p53
      %p152 = pneg %p77
      %p153 = pneg %p74
      %p154 = pneg %p103
      %p155 = pneg %p100
      %p156 = scmp.lt.s32.totalorder %s14, 1
      %s157 = scalar_select %p156, %s14, 1
      %s158 = smul.addr %s157, 8
      %s159 = scalar_lea.vmem %s3, %s158
      %p160 = scmp.lt.s32.totalorder %s14, 1
      %s161 = scalar_select %p160, %s14, 1
      %s162 = smul.addr %s161, 4
      %s163 = smul.addr %s162, 4
      %s164 = scalar_lea.vmem %s0, %s163
      %p165 = scmp.lt.s32.totalorder %s14, 1
      %s166 = scalar_select %p165, %s14, 1
      %s167 = smul.addr %s166, 8
      %s168 = scalar_lea.vmem %s3, %s167
      %v170 = vld [vmem:[%s164] sm:$0xff]
      %v171 = vld [vmem:[%s1] sm:$0xf]
      %v172 = vld [vmem:[%s1 + $0x4] sm:$0xf]
      %v173 = vld [vmem:[%s1 + $0x8] sm:$0xf]
      %v174 = vld [vmem:[%s1 + $0xc] sm:$0xf]
      %v175 = vld [vmem:[%s1 + $0x10] sm:$0xf]
      %v176 = vld [vmem:[%s1 + $0x14] sm:$0xf]
      %v177 = vld [vmem:[%s1 + $0x18] sm:$0xf]
      %v178 = vld [vmem:[%s1 + $0x1c] sm:$0xf]
      %v179 = vld [vmem:[%s1 + $0x20] sm:$0xf]
      %v180 = vld [vmem:[%s1 + $0x24] sm:$0xf]
      %v181 = vld [vmem:[%s1 + $0x28] sm:$0xf]
      %v182 = vld [vmem:[%s1 + $0x2c] sm:$0xf]
      %v183 = vld [vmem:[%s1 + $0x30] sm:$0xf]
      %v184 = vld [vmem:[%s1 + $0x34] sm:$0xf]
      %v185 = vld [vmem:[%s1 + $0x38] sm:$0xf]
      %v186 = vld [vmem:[%s1 + $0x3c] sm:$0xf]
      %v187 = vld [vmem:[%s1 + $0x40] sm:$0xf]
      %v188 = vld [vmem:[%s1 + $0x44] sm:$0xf]
      %v189 = vld [vmem:[%s1 + $0x48] sm:$0xf]
      %v190 = vld [vmem:[%s1 + $0x4c] sm:$0xf]
      %v191 = vld [vmem:[%s1 + $0x50] sm:$0xf]
      %v192 = vld [vmem:[%s164] sm:$0xee]
      %v193 = vld [vmem:[%s164 + $0x8] sm:$0x11]
      %s194 = scalar_lea.vmem %s1, 84
      %v195 = vld [vmem:[%s194] sm:$0xf]
      %v196 = vld [vmem:[%s194 + $0x4] sm:$0xf]
      %v197 = vld [vmem:[%s194 + $0x8] sm:$0xf]
      %v198 = vld [vmem:[%s194 + $0xc] sm:$0xf]
      %v199 = vld [vmem:[%s194 + $0x10] sm:$0xf]
      %v200 = vld [vmem:[%s194 + $0x14] sm:$0xf]
      %v201 = vld [vmem:[%s194 + $0x18] sm:$0xf]
      %v202 = vld [vmem:[%s194 + $0x1c] sm:$0xf]
      %v203 = vld [vmem:[%s194 + $0x20] sm:$0xf]
      %v204 = vld [vmem:[%s194 + $0x24] sm:$0xf]
      %v205 = vld [vmem:[%s194 + $0x28] sm:$0xf]
      %v206 = vld [vmem:[%s194 + $0x2c] sm:$0xf]
      %v207 = vld [vmem:[%s194 + $0x30] sm:$0xf]
      %v208 = vld [vmem:[%s194 + $0x34] sm:$0xf]
      %v209 = vld [vmem:[%s194 + $0x38] sm:$0xf]
      %v210 = vld [vmem:[%s194 + $0x3c] sm:$0xf]
      %v211 = vld [vmem:[%s194 + $0x40] sm:$0xf]
      %v212 = vld [vmem:[%s194 + $0x44] sm:$0xf]
      %v213 = vld [vmem:[%s194 + $0x48] sm:$0xf]
      %v214 = vld [vmem:[%s194 + $0x4c] sm:$0xf]
      %v215 = vld [vmem:[%s194 + $0x50] sm:$0xf]
      %v218 = vunpack.c.l.b16 %v192
      %v219 = vunpack.c.h.b16 %v192
      %v220 = vunpack.c.l.b16 %v193
      %v221 = vunpack.c.h.b16 %v193
      %v222 = vpack.c.b16 %v220, %v218
      %v223 = vpack.c.b16 %v221, %v219
      %v224 = vrot.slane %v222, 1
      %v225 = vrot.slane %v223, 1
      %v248 = vunpack.c.l.b16 %v195
      %v249 = vunpack.c.l.b16 %v196
      %v250 = vunpack.c.l.b16 %v197
      %v251 = vunpack.c.l.b16 %v198
      %v252 = vunpack.c.l.b16 %v199
      %v253 = vunpack.c.l.b16 %v200
      %v254 = vunpack.c.l.b16 %v201
      %v255 = vunpack.c.l.b16 %v202
      %v256 = vunpack.c.l.b16 %v203
      %v257 = vunpack.c.l.b16 %v204
      %v258 = vunpack.c.l.b16 %v205
      %v259 = vunpack.c.l.b16 %v206
      %v260 = vunpack.c.l.b16 %v207
      %v261 = vunpack.c.l.b16 %v208
      %v262 = vunpack.c.l.b16 %v209
      %v263 = vunpack.c.l.b16 %v210
      %v264 = vunpack.c.l.b16 %v211
      %v265 = vunpack.c.l.b16 %v212
      %v266 = vunpack.c.l.b16 %v213
      %v267 = vunpack.c.l.b16 %v214
      %v268 = vunpack.c.l.b16 %v215
      %v269 = vpack.c.b16 %v249, %v248
      %v270 = vpack.c.b16 %v251, %v250
      %v271 = vpack.c.b16 %v253, %v252
      %v272 = vpack.c.b16 %v255, %v254
      %v273 = vpack.c.b16 %v257, %v256
      %v274 = vpack.c.b16 %v259, %v258
      %v275 = vpack.c.b16 %v261, %v260
      %v276 = vpack.c.b16 %v263, %v262
      %v277 = vpack.c.b16 %v265, %v264
      %v278 = vpack.c.b16 %v267, %v266
      %v279 = vpack.c.b16 %v268, %v268
      %vm290 = vcmask 326656
      %v292 = vsel %vm290, %v225, 0
      %vm294 = vcmask 1043456
      %v296 = vsel %vm294, %v279, 0
      %298 = vmatprep.subr.bf16.mxu0 0
      %299 = vmatpush1.bf16.msra.mxu0 %v276
      %300 = vmatprep.subr.bf16.mxu0 0
      %301 = vmatpush1.bf16.msra.mxu0 %v275
      %302 = vmatprep.subr.bf16.mxu0 0
      %303 = vmatpush1.bf16.msra.mxu0 %v274
      %304 = vmatprep.subr.bf16.mxu0 0
      %305 = vmatpush1.bf16.msra.mxu0 %v273
      %306 = vmatprep.subr.bf16.mxu0 0
      %307 = vmatpush1.bf16.msra.mxu0 %v272
      %308 = vmatprep.subr.bf16.mxu0 0
      %309 = vmatpush1.bf16.msra.mxu0 %v271
      %310 = vmatprep.subr.bf16.mxu0 0
      %311 = vmatpush1.bf16.msra.mxu0 %v270
      %312 = vmatprep.subr.bf16.mxu0 0
      %313 = vmatpush1.bf16.msra.mxu0 %v269
      %314 = vmatprep.subr.bf16.mxu0 0
      %315 = vmatpush2.bf16.msra.mxu0 0
      %316 = vmatprep.subr.bf16.mxu0 0
      %317 = vmatpush2.bf16.msra.mxu0 0
      %318 = vmatprep.subr.bf16.mxu0 0
      %319 = vmatpush2.bf16.msra.mxu0 0
      %320 = vmatprep.subr.bf16.mxu0 0
      %321 = vmatpush2.bf16.msra.mxu0 0
      %322 = vmatprep.subr.bf16.mxu0 0
      %323 = vmatpush2.bf16.msra.mxu0 0
      %324 = vmatprep.subr.bf16.mxu0 0
      %325 = vmatpush2.bf16.msra.mxu0 %v296
      %326 = vmatprep.subr.bf16.mxu0 0
      %327 = vmatpush2.bf16.msra.mxu0 %v278
      %328 = vmatprep.subr.bf16.mxu0 0
      %329 = vmatpush2.bf16.msra.mxu0 %v277
      %330 = vmatprep.mubr.bf16.mxu0 %v292
      %331 = vmatmul.mubr.bf16.gmra.mxu0 %v224
      %v332 = vpop.f32.mrf.mxu0
      %v333 = vadd.f32 0.0, %v332
      %v334 = vpop.f32.mrf.mxu0
      %v335 = vpop.f32.mrf.mxu0
      %v336 = vpop.f32.mrf.mxu0
      %337 = vdwg.mxu0
      %v339 = vunpack.c.l.b16 %v170
      %v340 = vunpack.c.h.b16 %v170
      %v341 = vpack.c.b16 %v339, %v339
      %v342 = vpack.c.b16 %v340, %v340
      %v365 = vunpack.c.l.b16 %v171
      %v366 = vunpack.c.l.b16 %v172
      %v367 = vunpack.c.l.b16 %v173
      %v368 = vunpack.c.l.b16 %v174
      %v369 = vunpack.c.l.b16 %v175
      %v370 = vunpack.c.l.b16 %v176
      %v371 = vunpack.c.l.b16 %v177
      %v372 = vunpack.c.l.b16 %v178
      %v373 = vunpack.c.l.b16 %v179
      %v374 = vunpack.c.l.b16 %v180
      %v375 = vunpack.c.l.b16 %v181
      %v376 = vunpack.c.l.b16 %v182
      %v377 = vunpack.c.l.b16 %v183
      %v378 = vunpack.c.l.b16 %v184
      %v379 = vunpack.c.l.b16 %v185
      %v380 = vunpack.c.l.b16 %v186
      %v381 = vunpack.c.l.b16 %v187
      %v382 = vunpack.c.l.b16 %v188
      %v383 = vunpack.c.l.b16 %v189
      %v384 = vunpack.c.l.b16 %v190
      %v385 = vunpack.c.l.b16 %v191
      %v386 = vpack.c.b16 %v366, %v365
      %v387 = vpack.c.b16 %v368, %v367
      %v388 = vpack.c.b16 %v370, %v369
      %v389 = vpack.c.b16 %v372, %v371
      %v390 = vpack.c.b16 %v374, %v373
      %v391 = vpack.c.b16 %v376, %v375
      %v392 = vpack.c.b16 %v378, %v377
      %v393 = vpack.c.b16 %v380, %v379
      %v394 = vpack.c.b16 %v382, %v381
      %v395 = vpack.c.b16 %v384, %v383
      %v396 = vpack.c.b16 %v385, %v385
      %v408 = vsel %vm290, %v342, 0
      %v411 = vsel %vm294, %v396, 0
      %413 = vmatprep.subr.bf16.mxu0 0
      %414 = vmatpush1.bf16.msra.mxu0 %v393
      %415 = vmatprep.subr.bf16.mxu0 0
      %416 = vmatpush1.bf16.msra.mxu0 %v392
      %417 = vmatprep.subr.bf16.mxu0 0
      %418 = vmatpush1.bf16.msra.mxu0 %v391
      %419 = vmatprep.subr.bf16.mxu0 0
      %420 = vmatpush1.bf16.msra.mxu0 %v390
      %421 = vmatprep.subr.bf16.mxu0 0
      %422 = vmatpush1.bf16.msra.mxu0 %v389
      %423 = vmatprep.subr.bf16.mxu0 0
      %424 = vmatpush1.bf16.msra.mxu0 %v388
      %425 = vmatprep.subr.bf16.mxu0 0
      %426 = vmatpush1.bf16.msra.mxu0 %v387
      %427 = vmatprep.subr.bf16.mxu0 0
      %428 = vmatpush1.bf16.msra.mxu0 %v386
      %429 = vmatprep.subr.bf16.mxu0 0
      %430 = vmatpush2.bf16.msra.mxu0 0
      %431 = vmatprep.subr.bf16.mxu0 0
      %432 = vmatpush2.bf16.msra.mxu0 0
      %433 = vmatprep.subr.bf16.mxu0 0
      %434 = vmatpush2.bf16.msra.mxu0 0
      %435 = vmatprep.subr.bf16.mxu0 0
      %436 = vmatpush2.bf16.msra.mxu0 0
      %437 = vmatprep.subr.bf16.mxu0 0
      %438 = vmatpush2.bf16.msra.mxu0 0
      %439 = vmatprep.subr.bf16.mxu0 0
      %440 = vmatpush2.bf16.msra.mxu0 %v411
      %441 = vmatprep.subr.bf16.mxu0 0
      %442 = vmatpush2.bf16.msra.mxu0 %v395
      %443 = vmatprep.subr.bf16.mxu0 0
      %444 = vmatpush2.bf16.msra.mxu0 %v394
      %445 = vmatprep.mubr.bf16.mxu0 %v408
      %446 = vmatmul.mubr.bf16.gmra.mxu0 %v341
      %v447 = vpop.f32.mrf.mxu0
      %v448 = vadd.f32 %v333, %v447
      %v449 = vpop.f32.mrf.mxu0
      %v450 = vpop.f32.mrf.mxu0
      %v451 = vpop.f32.mrf.mxu0
      %452 = vdwg.mxu0
      %v453 = vld [vmem:[%s2] sm:$0x1]
      %v455 = vlaneseq
      %v456 = vshrl.u32 %v455, 7
      %v457 = vsub.s32 0, %v456
      %v458 = vrot.slane %v453, %v457
      %v460 = vadd.f32 %v448, %v458
      %461 = vst [vmem:[%s168] sm:$0xff] %v460
      %p462 = scmp.lt.s32.totalorder %s14, 1
      %s463 = scalar_select %p462, %s14, 1
      %s464 = smul.addr %s463, 8
      %s465 = scalar_lea.vmem %s3, %s464
      // Predicated region
      $region33: #{_lambda_.1} parent=31 // pred_check
        %p466 = pneg %p100
      $region34: #{_lambda_.1} parent=31 // pred_check_branch
        %468 = sbr.rel (%p466) target = $region36
      $region35: #{_lambda_.1} parent=31 // pred_region
        _
      $region36: #{_lambda_.1} parent=31 // pred_fallthru
        _
    $region32: #{_lambda_.1} parent=5 // pred_fallthru
      _
    %p469 = scmp.le.s32.totalorder 2, %s9
    // Predicated region
    $region37: #{_lambda_.1} parent=5 // pred_check
      %p470 = pneg %p469
    $region38: #{_lambda_.1} parent=5 // pred_check_branch
      %472 = sbr.rel (%p470) target = $region40
    $region39: #{_lambda_.1} parent=5 // pred_region
      %s473 = ssub.s32 %s9, 2
      // Predicated region
      $region41: #{_lambda_.1} parent=39 // pred_check
        %p474 = pneg %p106
      $region42: #{_lambda_.1} parent=39 // pred_check_branch
        %476 = sbr.rel (%p474) target = $region44
      $region43: #{_lambda_.1} parent=39 // pred_region
        %p477 = scmp.lt.s32.totalorder %s15, 1
        %s478 = scalar_select %p477, %s15, 1
        %s479 = smul.addr %s478, 8
        %s480 = scalar_lea.vmem %s3, %s479
      $region44: #{_lambda_.1} parent=39 // pred_fallthru
        _
    $region40: #{_lambda_.1} parent=5 // pred_fallthru
      _
  $region6: #{_lambda_.1} parent=0 // loop_footer
    %s13 = sadd.s32 1, %s9
  $region7: #{_lambda_.1} parent=0 // loop_footer_branch
    %8 = sbr.rel target = $region3
  $region8: #{_lambda_.1} parent=0 // loop_exit
    _

</llo_original>
